<compile_context>
chip_gen: v5e
topology: v5e:2x2
jax: 0.10.0
libtpu: 0.0.40
codegen_flags: <defaults>
</compile_context>

<pallas_src>
import functools

import jax
import jax.numpy as jnp
from jax.experimental import pallas as pl
from jax.experimental.pallas import tpu as pltpu


# ---------------------------------------------------------------------------
# Kernel: out = m*(a*rec + b*uk) + (1-m)*rec  ==  rec + b*m*(uk - rec),
#         with b = 1/(1+w), a = w/(1+w) = 1-b  (exact up to rounding).
# ---------------------------------------------------------------------------
def _dc_kernel(coef_ref, rec_ref, uk_ref, mask_ref, out_ref):
    b = coef_ref[0]                                  # SMEM scalar: 1/(1+w)
    rec = rec_ref[...].astype(jnp.float32)           # (1, C,  TW)
    uk = uk_ref[...].astype(jnp.float32)             # (1, C,  TW)
    m = mask_ref[...].astype(jnp.float32)            # (1, MC, TW), MC in {1, C}
    out_ref[...] = (rec + b * m * (uk - rec)).astype(out_ref.dtype)


def _pick_block_cols(n_cols, bytes_per_col,
                     target_bytes=1 << 20, cap_bytes=1536 * 1024):
    """Lane-dense column block: full H*W if small, else a multiple of 128
    targeting ~1 MiB per array (measured ~86% of HBM roofline on v6e), capped
    so 4 arrays x 2 pipeline buffers stay well under scoped VMEM everywhere."""
    if n_cols * bytes_per_col <= cap_bytes:
        return n_cols                      # full last dim (exempt from 128 rule)
    tw = min(target_bytes, cap_bytes) // bytes_per_col
    return max(128, (tw // 128) * 128)


def _dc_pallas(rec, u_k, mask, w):
    B, C, H, W = rec.shape
    dtype = rec.dtype
    itemsize = jnp.dtype(dtype).itemsize

    # Mask: keep its narrow storage dtype (cast to f32 inside the kernel);
    # bools only get widened to int8 so the DMA element type is supported.
    mask = jnp.asarray(mask)
    if mask.dtype == jnp.bool_:
        mask = mask.astype(jnp.int8)
    if mask.ndim < 4:
        mask = mask.reshape((1,) * (4 - mask.ndim) + mask.shape)
    if mask.shape[-2:] != (H, W):          # only spatial size-1 masks need this
        mask = jnp.broadcast_to(mask, mask.shape[:2] + (H, W))
    MB, MC = mask.shape[0], mask.shape[1]
    m_itemsize = jnp.dtype(mask.dtype).itemsize

    # Metadata-only reshape to a lane-dense layout: last dim H*W maps to lanes
    # (W alone can be < 128 -> masked partial stores), channel dim is the full
    # array dim so the sublane tiling rule is exempt for every dtype.
    HW = H * W
    rec2 = rec.reshape(B, C, HW)
    uk2 = u_k.reshape(B, C, HW)            # dtype may differ; kernel casts
    mask2 = mask.reshape(MB, MC, HW)

    TW = _pick_block_cols(HW, C * max(itemsize, jnp.dtype(u_k.dtype).itemsize))
    ncol = pl.cdiv(HW, TW)

    b_coef = (1.0 / (1.0 + jnp.asarray(w, jnp.float32))).reshape(1)

    data_map = lambda i, j: (i, 0, j)
    mask_map = lambda i, j: (i if MB > 1 else 0, 0, j)

    # VMEM budget: 2 pipeline buffers per array; keep the compiler limit
    # explicit (floor 32 MiB, cap below v7x's 64 MiB physical).
    blk = C * TW * itemsize
    uk_blk = C * TW * jnp.dtype(u_k.dtype).itemsize
    m_blk = MC * TW * m_itemsize
    dbl_buf = 2 * (2 * blk + uk_blk + m_blk)
    vmem_limit = int(min(48 << 20, max(32 << 20, 2 * dbl_buf)))

    cost = pl.CostEstimate(
        flops=int(3 * B * C * HW),
        transcendentals=0,
        bytes_accessed=int(2 * B * C * HW * itemsize            # rec read + out write
                           + B * C * HW * jnp.dtype(u_k.dtype).itemsize
                           + MB * MC * HW * m_itemsize),
    )

    out = pl.pallas_call(
        _dc_kernel,
        out_shape=jax.ShapeDtypeStruct((B, C, HW), dtype),
        grid=(B, ncol),
        in_specs=[
            pl.BlockSpec(memory_space=pltpu.SMEM),     # b = 1/(1+w) scalar
            pl.BlockSpec((1, C, TW), data_map),        # rec
            pl.BlockSpec((1, C, TW), data_map),        # u_k
            pl.BlockSpec((1, MC, TW), mask_map),       # mask (read once per block)
        ],
        out_specs=pl.BlockSpec((1, C, TW), data_map),
        compiler_params=pltpu.CompilerParams(
            dimension_semantics=("parallel", "parallel"),  # v7x: split over 2 TCs
            vmem_limit_bytes=vmem_limit),
        cost_estimate=cost,
    )(b_coef, rec2, uk2, mask2)

    return out.reshape(B, C, H, W)


def _fft2_ortho(x):
    c = x[:, 0, :, :] + 1j * x[:, 1, :, :]
    k = jnp.fft.fft2(c, norm="ortho")
    return jnp.stack([jnp.real(k), jnp.imag(k)], axis=1)


def _ifft2_ortho(x):
    c = x[:, 0, :, :] + 1j * x[:, 1, :, :]
    img = jnp.fft.ifft2(c, norm="ortho")
    return jnp.stack([jnp.real(img), jnp.imag(img)], axis=1)


@functools.partial(jax.jit, static_argnames=("is_img",))
def dc_forward(rec, u_k, mask, w, is_img=False):
    """Pallas implementation of DC.forward."""
    mask = jnp.asarray(mask)
    w = jnp.asarray(w, jnp.float32)

    if is_img:
        # FFT dominates this branch; for the usual spatial mask (same for
        # real/imag) apply the linear DC update directly on the complex array
        # and let XLA fuse it into the ifft input -> no stack/real/imag passes.
        # TODO(synk): fft2/ifft2 have no Pallas equivalent; computed with jnp.
        m4 = mask if mask.ndim >= 4 else mask.reshape(
            (1,) * (4 - mask.ndim) + mask.shape)
        if m4.shape[1] == 1:
            rec_c = rec[:, 0] + 1j * rec[:, 1]
            rec_k = jnp.fft.fft2(rec_c, norm="ortho")
            uk_c = (u_k[:, 0] + 1j * u_k[:, 1]).astype(rec_k.dtype)
            m = m4[:, 0].astype(jnp.float32)
            b = 1.0 / (1.0 + w)
            res_k = rec_k + b * m * (uk_c - rec_k)
            img = jnp.fft.ifft2(res_k, norm="ortho")
            return jnp.stack([jnp.real(img), jnp.imag(img)], axis=1).astype(rec.dtype)
        # uncommon per-channel mask: fft -> Pallas DC -> ifft
        rec_k = _fft2_ortho(rec)
        out_k = _dc_pallas(rec_k, u_k, mask, w)
        return _ifft2_ortho(out_k)

    return _dc_pallas(rec, u_k, mask, w)


def _dc_reference(rec, u_k, mask, w, is_img=False):
    if is_img:
        rec = _fft2_ortho(rec)
    result = mask * (rec * w / (1.0 + w) + u_k * (1.0 / (w + 1.0)))
    result = result + (1.0 - mask) * rec
    if is_img:
        result = _ifft2_ortho(result)
    return result


if __name__ == "__main__":
    key = jax.random.PRNGKey(0)
    k1, k2, k3 = jax.random.split(key, 3)

    B, C, H, W = 2, 2, 16, 16              # C=2 -> (real, imag) channels
    rec = jax.random.normal(k1, (B, C, H, W), dtype=jnp.float32)
    u_k = jax.random.normal(k2, (B, C, H, W), dtype=jnp.float32)
    # binary undersampling mask, un-broadcast over the channel dim
    mask_hw = (jax.random.uniform(k3, (B, 1, H, W)) > 0.5).astype(jnp.float32)
    w = jnp.float32(0.1)                   # matches nn.Parameter(torch.tensor(0.1))

    # k-space path (is_img=False), un-broadcast mask (reused across channels)
    out = jax.block_until_ready(dc_forward(rec, u_k, mask_hw, w, is_img=False))
    ref = _dc_reference(rec, u_k, mask_hw, w, is_img=False)
    assert jnp.allclose(out, ref, atol=1e-5, rtol=1e-5)

    # fully materialized (B, C, H, W) mask
    mask_full = jnp.broadcast_to(mask_hw, (B, C, H, W))
    out_f = jax.block_until_ready(dc_forward(rec, u_k, mask_full, w, is_img=False))
    assert jnp.allclose(out_f, ref, atol=1e-5, rtol=1e-5)

    # narrow (int8) mask storage: widened to f32 inside the kernel, not in HBM
    mask_i8 = mask_hw.astype(jnp.int8)
    out_i = jax.block_until_ready(dc_forward(rec, u_k, mask_i8, w, is_img=False))
    assert jnp.allclose(out_i, ref, atol=1e-5, rtol=1e-5)

    # image-domain path (fft / ifft in jnp; DC update fused in complex domain)
    out_img = jax.block_until_ready(dc_forward(rec, u_k, mask_hw, w, is_img=True))
    ref_img = _dc_reference(rec, u_k, mask_hw, w, is_img=True)
    assert jnp.allclose(out_img, ref_img, atol=1e-4, rtol=1e-4)

    print("KERNEL_OK")
</pallas_src>

<mosaic_0001>
module attributes {stable_mosaic.version = 11 : i64} {
  func.func @_dc_kernel(%arg0: i32, %arg1: i32, %arg2: memref<1xf32, #tpu.memory_space<smem>>, %arg3: memref<1x2x256xf32, #tpu.memory_space<vmem>>, %arg4: memref<1x2x256xf32, #tpu.memory_space<vmem>>, %arg5: memref<1x1x256xf32, #tpu.memory_space<vmem>>, %arg6: memref<1x2x256xf32, #tpu.memory_space<vmem>>) attributes {dimension_semantics = [#tpu.dimension_semantics<parallel>, #tpu.dimension_semantics<parallel>], iteration_bounds = array<i64: 2, 1>, scalar_prefetch = 0 : i64, scratch_operands = 0 : i64, tpu.core_type = #tpu.core_type<tc>, window_params = [{transform_indices = @transform_0, window_bounds = array<i64: 1>}, {transform_indices = @transform_1, window_bounds = array<i64: 1, 2, 256>}, {transform_indices = @transform_2, window_bounds = array<i64: 1, 2, 256>}, {transform_indices = @transform_3, window_bounds = array<i64: 1, 1, 256>}, {transform_indices = @transform_4, window_bounds = array<i64: 1, 2, 256>}]} {
    %c0 = arith.constant 0 : index
    %0 = memref.load %arg2[%c0] : memref<1xf32, #tpu.memory_space<smem>>
    %c0_0 = arith.constant 0 : index
    %c0_1 = arith.constant 0 : index
    %c0_2 = arith.constant 0 : index
    %1 = vector.load %arg3[%c0_0, %c0_1, %c0_2] : memref<1x2x256xf32, #tpu.memory_space<vmem>>, vector<1x2x256xf32>
    %c0_3 = arith.constant 0 : index
    %c0_4 = arith.constant 0 : index
    %c0_5 = arith.constant 0 : index
    %2 = vector.load %arg4[%c0_3, %c0_4, %c0_5] : memref<1x2x256xf32, #tpu.memory_space<vmem>>, vector<1x2x256xf32>
    %c0_6 = arith.constant 0 : index
    %c0_7 = arith.constant 0 : index
    %c0_8 = arith.constant 0 : index
    %3 = vector.load %arg5[%c0_6, %c0_7, %c0_8] : memref<1x1x256xf32, #tpu.memory_space<vmem>>, vector<1x1x256xf32>
    %4 = vector.broadcast %0 : f32 to vector<1x1x256xf32>
    %5 = arith.mulf %4, %3 : vector<1x1x256xf32>
    %6 = arith.subf %2, %1 : vector<1x2x256xf32>
    %7 = vector.broadcast %5 : vector<1x1x256xf32> to vector<1x2x256xf32>
    %8 = arith.mulf %7, %6 : vector<1x2x256xf32>
    %9 = arith.addf %1, %8 : vector<1x2x256xf32>
    %c0_9 = arith.constant 0 : index
    %c0_10 = arith.constant 0 : index
    %c0_11 = arith.constant 0 : index
    %10 = vector.load %arg6[%c0_9, %c0_10, %c0_11] : memref<1x2x256xf32, #tpu.memory_space<vmem>>, vector<1x2x256xf32>
    tpu.vector_store %arg6[%c0_9, %c0_10, %c0_11], %9 {strides = array<i32>} : memref<1x2x256xf32, #tpu.memory_space<vmem>>, vector<1x2x256xf32>,
    return
  }
  func.func @transform_0(%arg0: i32, %arg1: i32) -> i32 {
    %c0_i32 = arith.constant 0 : i32
    %c0_i32_0 = arith.constant 0 : i32
    return %c0_i32 : i32
  }
  func.func @transform_1(%arg0: i32, %arg1: i32) -> (i32, i32, i32) {
    %c0_i32 = arith.constant 0 : i32
    %c0_i32_0 = arith.constant 0 : i32
    return %arg0, %c0_i32, %arg1 : i32, i32, i32
  }
  func.func @transform_2(%arg0: i32, %arg1: i32) -> (i32, i32, i32) {
    %c0_i32 = arith.constant 0 : i32
    %c0_i32_0 = arith.constant 0 : i32
    return %arg0, %c0_i32, %arg1 : i32, i32, i32
  }
  func.func @transform_3(%arg0: i32, %arg1: i32) -> (i32, i32, i32) {
    %c0_i32 = arith.constant 0 : i32
    %c0_i32_0 = arith.constant 0 : i32
    return %arg0, %c0_i32, %arg1 : i32, i32, i32
  }
  func.func @transform_4(%arg0: i32, %arg1: i32) -> (i32, i32, i32) {
    %c0_i32 = arith.constant 0 : i32
    %c0_i32_0 = arith.constant 0 : i32
    return %arg0, %c0_i32, %arg1 : i32, i32, i32
  }
}

</mosaic_0001>

<llo_original>
// kernel: dc_forward.1
$region0: #{dc_forward.1}
  #allocation0 [shape = 'u32[]', space=smem, size = 0x4, offset = 0x4, fixed_abs, tag = 'smem constant byte address 0x4 - core index']
  #allocation1 [shape = 'u32[72,128]{1,0:T(1,128)}', space=vmem, size = 0x9000, scoped, tag = 'internal scratch']
  #allocation2 [shape = 'f32[1]{0:T(128)S(6)}', space=smem, size = 0x200, scoped, tag = 'scoped memory for dc_forward.1']
  %s0 = inlined_call_operand.<no memory space> [shape: f32[1], index: 0, kind: input, shape index: {}]
  %s1 = inlined_call_operand.vmem [shape: f32[2,2,256], index: 1, kind: input, shape index: {}]
  %s2 = inlined_call_operand.vmem [shape: f32[2,2,256], index: 2, kind: input, shape index: {}]
  %s3 = inlined_call_operand.vmem [shape: f32[2,1,256], index: 3, kind: input, shape index: {}]
  %s4 = inlined_call_operand.vmem [shape: f32[2,2,256], index: 4, kind: output, shape index: {}]
  %s5 = sld [smem:[#allocation0]]
  $region49: #{dc_forward.1} parent=0
    _
  %s7 = ssub.s32 1, %s5
  %s8 = scalar_select 0, %s7, %s5
  %9 = sst [smem:[#allocation2]] %s0
  loop: start=0, step=1, limit=4
  $region2: #{dc_forward.1} parent=0 // loop_pre_header
    _
  $region3: #{dc_forward.1} parent=0 // loop_header
    %s11 = sphi 0, %s15
    %p12 = scmp.ge.s32.totalorder %s11, 4
    %s18 = sphi 0, %s30
    %s19 = sphi 0, %s26
    %s20 = sphi 0, %s18
    %s21 = sphi 0, %s19
    %s22 = sphi 0, %s20
    %s23 = sphi 0, %s21
    %s31 = sphi 0, %s31
    %s33 = sphi 0, %s31
    %s34 = sphi 0, %s33
    %s48 = sphi 0, %s34
    %s56 = sphi 0, %s58
    %s59 = sphi 0, %s56
    %s60 = sphi 0, %s59
    %s76 = sphi 0, %s60
    %s84 = sphi 0, %s86
    %s87 = sphi 0, %s84
    %s88 = sphi 0, %s87
    %s104 = sphi 0, %s88
    %s112 = sphi 0, %s114
    %s115 = sphi 0, %s112
    %s116 = sphi 0, %s115
    %s132 = sphi 0, %s116
    %s140 = sphi 0, %s142
    %s143 = sphi 0, %s140
    %s144 = sphi 0, %s143
    %s160 = sphi 0, %s144
  $region4: #{dc_forward.1} parent=0 // loop_header_branch
    %14 = sbr.rel (%p12) target = $region8
  $region5: #{dc_forward.1} parent=0 // loop_body
    %s16 = ssub.s32 %s11, 1
    %s17 = ssub.s32 %s11, 2
    %s24 = sadd.s32 1, %s19
    %p25 = scmp.ge.s32.totalorder %s24, 1
    %s26 = scalar_select %p25, 0, %s24
    %s27 = sadd.s32 1, %s18
    %s28 = scalar_select %p25, %s27, %s18
    %p29 = scmp.ge.s32.totalorder %s28, 2
    %s30 = scalar_select %p29, 0, %s28
    %s32 = sadd.s32 %s31, 1
    %p35 = scmp.eq.s32.totalorder %s11, 1
    %p36 = scmp.ne.s32.totalorder %s31, %s33
    %p37 = scmp.eq.s32.totalorder %s11, 0
    %p38 = por %p36, %p37
    %p39 = scmp.ne.s32.totalorder %s31, %s33
    %p40 = scmp.eq.s32.totalorder %s16, 1
    %p41 = por %p39, %p40
    %p42 = scmp.ne.s32.totalorder %s33, %s34
    %p43 = scmp.eq.s32.totalorder %s16, 0
    %p44 = por %p42, %p43
    %p45 = scmp.ne.s32.totalorder %s33, %s34
    %p46 = scmp.eq.s32.totalorder %s17, 1
    %p47 = por %p45, %p46
    %p49 = scmp.ne.s32.totalorder %s34, %s48
    %p50 = scmp.eq.s32.totalorder %s17, 0
    %p51 = por %p49, %p50
    %s52 = ssub.s32 %s18, %s30
    %s53 = ssub.s32 %s19, %s26
    %s54 = sor.u32 %s52, %s53
    %p55 = scmp.eq.s32.totalorder %s54, 0
    %s57 = sadd.s32 %s56, 1
    %s58 = scalar_select %p55, %s56, %s57
    %p61 = pneg %p55
    %p62 = scmp.eq.s32.totalorder %s11, 1
    %p63 = por %p61, %p62
    %p64 = scmp.ne.s32.totalorder %s56, %s59
    %p65 = scmp.eq.s32.totalorder %s11, 0
    %p66 = por %p64, %p65
    %p67 = scmp.ne.s32.totalorder %s56, %s59
    %p68 = scmp.eq.s32.totalorder %s16, 1
    %p69 = por %p67, %p68
    %p70 = scmp.ne.s32.totalorder %s59, %s60
    %p71 = scmp.eq.s32.totalorder %s16, 0
    %p72 = por %p70, %p71
    %p73 = scmp.ne.s32.totalorder %s59, %s60
    %p74 = scmp.eq.s32.totalorder %s17, 1
    %p75 = por %p73, %p74
    %p77 = scmp.ne.s32.totalorder %s60, %s76
    %p78 = scmp.eq.s32.totalorder %s17, 0
    %p79 = por %p77, %p78
    %s80 = ssub.s32 %s18, %s30
    %s81 = ssub.s32 %s19, %s26
    %s82 = sor.u32 %s80, %s81
    %p83 = scmp.eq.s32.totalorder %s82, 0
    %s85 = sadd.s32 %s84, 1
    %s86 = scalar_select %p83, %s84, %s85
    %p89 = pneg %p83
    %p90 = scmp.eq.s32.totalorder %s11, 1
    %p91 = por %p89, %p90
    %p92 = scmp.ne.s32.totalorder %s84, %s87
    %p93 = scmp.eq.s32.totalorder %s11, 0
    %p94 = por %p92, %p93
    %p95 = scmp.ne.s32.totalorder %s84, %s87
    %p96 = scmp.eq.s32.totalorder %s16, 1
    %p97 = por %p95, %p96
    %p98 = scmp.ne.s32.totalorder %s87, %s88
    %p99 = scmp.eq.s32.totalorder %s16, 0
    %p100 = por %p98, %p99
    %p101 = scmp.ne.s32.totalorder %s87, %s88
    %p102 = scmp.eq.s32.totalorder %s17, 1
    %p103 = por %p101, %p102
    %p105 = scmp.ne.s32.totalorder %s88, %s104
    %p106 = scmp.eq.s32.totalorder %s17, 0
    %p107 = por %p105, %p106
    %s108 = ssub.s32 %s18, %s30
    %s109 = ssub.s32 %s19, %s26
    %s110 = sor.u32 %s108, %s109
    %p111 = scmp.eq.s32.totalorder %s110, 0
    %s113 = sadd.s32 %s112, 1
    %s114 = scalar_select %p111, %s112, %s113
    %p117 = pneg %p111
    %p118 = scmp.eq.s32.totalorder %s11, 1
    %p119 = por %p117, %p118
    %p120 = scmp.ne.s32.totalorder %s112, %s115
    %p121 = scmp.eq.s32.totalorder %s11, 0
    %p122 = por %p120, %p121
    %p123 = scmp.ne.s32.totalorder %s112, %s115
    %p124 = scmp.eq.s32.totalorder %s16, 1
    %p125 = por %p123, %p124
    %p126 = scmp.ne.s32.totalorder %s115, %s116
    %p127 = scmp.eq.s32.totalorder %s16, 0
    %p128 = por %p126, %p127
    %p129 = scmp.ne.s32.totalorder %s115, %s116
    %p130 = scmp.eq.s32.totalorder %s17, 1
    %p131 = por %p129, %p130
    %p133 = scmp.ne.s32.totalorder %s116, %s132
    %p134 = scmp.eq.s32.totalorder %s17, 0
    %p135 = por %p133, %p134
    %s136 = ssub.s32 %s18, %s30
    %s137 = ssub.s32 %s19, %s26
    %s138 = sor.u32 %s136, %s137
    %p139 = scmp.eq.s32.totalorder %s138, 0
    %s141 = sadd.s32 %s140, 1
    %s142 = scalar_select %p139, %s140, %s141
    %p145 = pneg %p139
    %p146 = scmp.eq.s32.totalorder %s11, 1
    %p147 = por %p145, %p146
    %p148 = scmp.ne.s32.totalorder %s140, %s143
    %p149 = scmp.eq.s32.totalorder %s11, 0
    %p150 = por %p148, %p149
    %p151 = scmp.ne.s32.totalorder %s140, %s143
    %p152 = scmp.eq.s32.totalorder %s16, 1
    %p153 = por %p151, %p152
    %p154 = scmp.ne.s32.totalorder %s143, %s144
    %p155 = scmp.eq.s32.totalorder %s16, 0
    %p156 = por %p154, %p155
    %p157 = scmp.ne.s32.totalorder %s143, %s144
    %p158 = scmp.eq.s32.totalorder %s17, 1
    %p159 = por %p157, %p158
    %p161 = scmp.ne.s32.totalorder %s144, %s160
    %p162 = scmp.eq.s32.totalorder %s17, 0
    %p163 = por %p161, %p162
    %p164 = scmp.le.s32.totalorder 1, %s11
    %p165 = scmp.lt.s32.totalorder %s11, 3
    %p166 = pnand %p164, %p165
    %p167 = pneg %p166
    // Predicated region
    $region9: #{dc_forward.1} parent=5 // pred_check
      _
    $region10: #{dc_forward.1} parent=5 // pred_check_branch
      %169 = sbr.rel (%p166) target = $region12
    $region11: #{dc_forward.1} parent=5 // pred_region
      %s170 = ssub.s32 %s11, 1
      // Predicated region
      $region13: #{dc_forward.1} parent=11 // pred_check
        %p171 = pneg %p44
      $region14: #{dc_forward.1} parent=11 // pred_check_branch
        %173 = sbr.rel (%p171) target = $region16
      $region15: #{dc_forward.1} parent=11 // pred_region
        _
      $region16: #{dc_forward.1} parent=11 // pred_fallthru
        _
    $region12: #{dc_forward.1} parent=5 // pred_fallthru
      _
    %p174 = scmp.lt.s32.totalorder %s11, 2
    // Predicated region
    $region17: #{dc_forward.1} parent=5 // pred_check
      %p175 = pneg %p174
    $region18: #{dc_forward.1} parent=5 // pred_check_branch
      %177 = sbr.rel (%p175) target = $region20
    $region19: #{dc_forward.1} parent=5 // pred_region
      // Predicated region
      $region21: #{dc_forward.1} parent=19 // pred_check
        %p178 = pneg %p66
      $region22: #{dc_forward.1} parent=19 // pred_check_branch
        %180 = sbr.rel (%p178) target = $region24
      $region23: #{dc_forward.1} parent=19 // pred_region
        %s181 = smul.u32 2, %s19
        %p182 = scmp.lt.s32.totalorder %s18, 1
        %s183 = scalar_select %p182, %s18, 1
        %p184 = scmp.lt.s32.totalorder %s181, 1
        %s185 = scalar_select %p184, %s181, 1
        %s186 = smul.addr %s183, 2
        %s187 = sadd.s32 %s185, %s186
        %s188 = smul.addr %s187, 2
        %s189 = scalar_lea.vmem %s1, %s188
        %s190 = smul.u32 2, %s19
      $region24: #{dc_forward.1} parent=19 // pred_fallthru
        _
      // Predicated region
      $region25: #{dc_forward.1} parent=19 // pred_check
        %p191 = pneg %p94
      $region26: #{dc_forward.1} parent=19 // pred_check_branch
        %193 = sbr.rel (%p191) target = $region28
      $region27: #{dc_forward.1} parent=19 // pred_region
        %s194 = smul.u32 2, %s19
        %p195 = scmp.lt.s32.totalorder %s18, 1
        %s196 = scalar_select %p195, %s18, 1
        %p197 = scmp.lt.s32.totalorder %s194, 1
        %s198 = scalar_select %p197, %s194, 1
        %s199 = smul.addr %s196, 2
        %s200 = sadd.s32 %s198, %s199
        %s201 = smul.addr %s200, 2
        %s202 = scalar_lea.vmem %s2, %s201
        %s203 = smul.u32 2, %s19
      $region28: #{dc_forward.1} parent=19 // pred_fallthru
        _
      // Predicated region
      $region29: #{dc_forward.1} parent=19 // pred_check
        %p204 = pneg %p122
      $region30: #{dc_forward.1} parent=19 // pred_check_branch
        %206 = sbr.rel (%p204) target = $region32
      $region31: #{dc_forward.1} parent=19 // pred_region
        %s207 = smul.u32 2, %s19
        %p208 = scmp.lt.s32.totalorder %s18, 1
        %s209 = scalar_select %p208, %s18, 1
        %p210 = scmp.lt.s32.totalorder %s207, 1
        %s211 = scalar_select %p210, %s207, 1
        %s212 = smul.addr %s209, 2
        %s213 = sadd.s32 %s211, %s212
        %s214 = scalar_lea.vmem %s3, %s213
        %s215 = smul.u32 2, %s19
      $region32: #{dc_forward.1} parent=19 // pred_fallthru
        _
    $region20: #{dc_forward.1} parent=5 // pred_fallthru
      _
    %p216 = scmp.le.s32.totalorder 1, %s11
    %p217 = scmp.lt.s32.totalorder %s11, 3
    %p218 = pnand %p216, %p217
    %p219 = pneg %p218
    // Predicated region
    $region33: #{dc_forward.1} parent=5 // pred_check
      _
    $region34: #{dc_forward.1} parent=5 // pred_check_branch
      %221 = sbr.rel (%p218) target = $region36
    $region35: #{dc_forward.1} parent=5 // pred_region
      %s222 = ssub.s32 %s11, 1
      %p223 = pneg %p44
      %p224 = pneg %p41
      %s225 = smul.u32 2, %s21
      %p226 = scmp.lt.s32.totalorder %s20, 1
      %s227 = scalar_select %p226, %s20, 1
      %p228 = scmp.lt.s32.totalorder %s225, 1
      %s229 = scalar_select %p228, %s225, 1
      %s230 = smul.addr %s227, 2
      %s231 = sadd.s32 %s229, %s230
      %s232 = smul.addr %s231, 2
      %s233 = scalar_lea.vmem %s1, %s232
      %p234 = pneg %p72
      %p235 = pneg %p69
      %s236 = smul.u32 2, %s21
      %p237 = scmp.lt.s32.totalorder %s20, 1
      %s238 = scalar_select %p237, %s20, 1
      %p239 = scmp.lt.s32.totalorder %s236, 1
      %s240 = scalar_select %p239, %s236, 1
      %s241 = smul.addr %s238, 2
      %s242 = sadd.s32 %s240, %s241
      %s243 = smul.addr %s242, 2
      %s244 = scalar_lea.vmem %s2, %s243
      %p245 = pneg %p100
      %p246 = pneg %p97
      %s247 = smul.u32 2, %s21
      %p248 = scmp.lt.s32.totalorder %s20, 1
      %s249 = scalar_select %p248, %s20, 1
      %p250 = scmp.lt.s32.totalorder %s247, 1
      %s251 = scalar_select %p250, %s247, 1
      %s252 = smul.addr %s249, 2
      %s253 = sadd.s32 %s251, %s252
      %s254 = scalar_lea.vmem %s3, %s253
      %p255 = pneg %p128
      %p256 = pneg %p125
      %p257 = pneg %p156
      %p258 = pneg %p153
      %s259 = smul.u32 2, %s21
      %p260 = scmp.lt.s32.totalorder %s20, 1
      %s261 = scalar_select %p260, %s20, 1
      %p262 = scmp.lt.s32.totalorder %s259, 1
      %s263 = scalar_select %p262, %s259, 1
      %s264 = smul.addr %s261, 2
      %s265 = sadd.s32 %s263, %s264
      %s266 = smul.addr %s265, 2
      %s267 = scalar_lea.vmem %s4, %s266
      %s268 = smul.u32 2, %s21
      %p269 = scmp.lt.s32.totalorder %s20, 1
      %s270 = scalar_select %p269, %s20, 1
      %p271 = scmp.lt.s32.totalorder %s268, 1
      %s272 = scalar_select %p271, %s268, 1
      %s273 = smul.addr %s270, 2
      %s274 = sadd.s32 %s272, %s273
      %s275 = smul.addr %s274, 2
      %s276 = scalar_lea.vmem %s1, %s275
      %s277 = smul.u32 2, %s21
      %s278 = smul.u32 2, %s21
      %p279 = scmp.lt.s32.totalorder %s20, 1
      %s280 = scalar_select %p279, %s20, 1
      %p281 = scmp.lt.s32.totalorder %s278, 1
      %s282 = scalar_select %p281, %s278, 1
      %s283 = smul.addr %s280, 2
      %s284 = sadd.s32 %s282, %s283
      %s285 = smul.addr %s284, 2
      %s286 = scalar_lea.vmem %s2, %s285
      %s287 = smul.u32 2, %s21
      %s288 = smul.u32 2, %s21
      %p289 = scmp.lt.s32.totalorder %s20, 1
      %s290 = scalar_select %p289, %s20, 1
      %p291 = scmp.lt.s32.totalorder %s288, 1
      %s292 = scalar_select %p291, %s288, 1
      %s293 = smul.addr %s290, 2
      %s294 = sadd.s32 %s292, %s293
      %s295 = scalar_lea.vmem %s3, %s294
      %s296 = smul.u32 2, %s21
      %s297 = smul.u32 2, %s21
      %p298 = scmp.lt.s32.totalorder %s20, 1
      %s299 = scalar_select %p298, %s20, 1
      %p300 = scmp.lt.s32.totalorder %s297, 1
      %s301 = scalar_select %p300, %s297, 1
      %s302 = smul.addr %s299, 2
      %s303 = sadd.s32 %s301, %s302
      %s304 = smul.addr %s303, 2
      %s305 = scalar_lea.vmem %s4, %s304
      %s306 = smul.u32 2, %s21
      %s307 = sld [smem:[#allocation2]]
      %v308 = vld [vmem:[%s276] sm:$0xf]
      %v309 = vld [vmem:[%s286] sm:$0xf]
      %v310 = vld [vmem:[%s295] sm:$0x3]
      %v311 = vstv %s307
      %v312 = vmul.f32 %v311, %v310
      %v313 = vsub.f32 %v309, %v308
      %v315 = vperm.slane %v312, 0
      %v316 = vperm.slane %v312, 1
      %320 = vst [vmem:[#allocation1] ss:$4 sm:$0xff] %v313
      %v321 = vld.sshfl [vmem:[#allocation1] sm:$0xff pattern:$0x73625140]
      %v322 = vld.sshfl [vmem:[#allocation1 + $0x8] sm:$0xff pattern:$0x73625140]
      %v325 = vmul.f32 %v315, %v321
      %v326 = vmul.f32 %v316, %v322
      %v329 = vrot.slane %v326, 6
      %vm330 = vcmask 1041408
      %v331 = vsel %vm330, %v325, %v329
      %v333 = vadd.f32 %v308, %v331
      %334 = vst [vmem:[%s305] sm:$0xf] %v333
      %s335 = smul.u32 2, %s21
      %p336 = scmp.lt.s32.totalorder %s20, 1
      %s337 = scalar_select %p336, %s20, 1
      %p338 = scmp.lt.s32.totalorder %s335, 1
      %s339 = scalar_select %p338, %s335, 1
      %s340 = smul.addr %s337, 2
      %s341 = sadd.s32 %s339, %s340
      %s342 = smul.addr %s341, 2
      %s343 = scalar_lea.vmem %s4, %s342
      // Predicated region
      $region37: #{dc_forward.1} parent=35 // pred_check
        %p344 = pneg %p153
      $region38: #{dc_forward.1} parent=35 // pred_check_branch
        %346 = sbr.rel (%p344) target = $region40
      $region39: #{dc_forward.1} parent=35 // pred_region
        %s347 = smul.u32 2, %s21
      $region40: #{dc_forward.1} parent=35 // pred_fallthru
        _
    $region36: #{dc_forward.1} parent=5 // pred_fallthru
      _
    %p348 = scmp.le.s32.totalorder 2, %s11
    // Predicated region
    $region41: #{dc_forward.1} parent=5 // pred_check
      %p349 = pneg %p348
    $region42: #{dc_forward.1} parent=5 // pred_check_branch
      %351 = sbr.rel (%p349) target = $region44
    $region43: #{dc_forward.1} parent=5 // pred_region
      %s352 = ssub.s32 %s11, 2
      // Predicated region
      $region45: #{dc_forward.1} parent=43 // pred_check
        %p353 = pneg %p159
      $region46: #{dc_forward.1} parent=43 // pred_check_branch
        %355 = sbr.rel (%p353) target = $region48
      $region47: #{dc_forward.1} parent=43 // pred_region
        %s356 = smul.u32 2, %s23
        %p357 = scmp.lt.s32.totalorder %s22, 1
        %s358 = scalar_select %p357, %s22, 1
        %p359 = scmp.lt.s32.totalorder %s356, 1
        %s360 = scalar_select %p359, %s356, 1
        %s361 = smul.addr %s358, 2
        %s362 = sadd.s32 %s360, %s361
        %s363 = smul.addr %s362, 2
        %s364 = scalar_lea.vmem %s4, %s363
      $region48: #{dc_forward.1} parent=43 // pred_fallthru
        _
    $region44: #{dc_forward.1} parent=5 // pred_fallthru
      _
  $region6: #{dc_forward.1} parent=0 // loop_footer
    %s15 = sadd.s32 1, %s11
  $region7: #{dc_forward.1} parent=0 // loop_footer_branch
    %10 = sbr.rel target = $region3
  $region8: #{dc_forward.1} parent=0 // loop_exit
    _

</llo_original>
